<compile_context>
chip_gen: v5e
topology: v5e:2x2
jax: 0.10.0
libtpu: 0.0.40
codegen_flags: <defaults>
</compile_context>

<pallas_src>
import functools

import jax
import jax.numpy as jnp
import numpy as np
from jax.experimental import pallas as pl
from jax.experimental.pallas import tpu as pltpu

_CELLS = 81  # 9 * 9 board cells, kept lane-dense (no padding to 128 lanes)


def _numbers_in_cell_kernel(x_ref, o_ref, *, number_to_compare):
    """x_ref: (TB, 9, 81) candidate-bit planes in VMEM.  o_ref: (TB, 81)."""
    # select_number_conv: 1x1 conv, weight=1, bias=0  ==  sum over the 9 channels
    # (channel axis is the sublane axis of each (9, 81) slab -> XLU reduce,
    # off the VPU critical path).
    s = jnp.sum(x_ref[...], axis=1)                                 # (TB, 81) f32
    # NNCompare(s, n) = fmin(relu(s - n + 1), relu(n + 1 - s)); inputs finite
    # so fmin == min.  Constants folded at trace time.
    a = jnp.maximum(s + (1.0 - number_to_compare), 0.0)
    b = jnp.maximum((number_to_compare + 1.0) - s, 0.0)
    o_ref[...] = jnp.minimum(a, b)                                  # single bulk store


def sudoku_numbers_in_cell(
    x_nchw: jax.Array,
    number_to_compare: float = 1.0,
    *,
    block_b: int = 1024,
    use_pallas: bool = True,
) -> jax.Array:
    """x_nchw: (B, 9, 9, 9) float32 -> (B, 1, 9, 9) float32."""
    B, C, H, W = x_nchw.shape
    assert (C, H, W) == (9, 9, 9), "expected (B, 9, 9, 9) NCHW input"
    x = x_nchw.astype(jnp.float32)

    if not use_pallas:
        # Pure-JAX fallback (XLA fuses this into one pass); handy for tiny
        # batches where pallas_call launch overhead would dominate.
        return _reference(x, number_to_compare)

    xf = x.reshape(B, 9, _CELLS)          # free reshape, stays contiguous

    # Batch tile: either the full batch (full-dim exception of the (8,128)
    # rule) or a multiple of 8 so the (tb, 81) output block keeps a legal
    # sublane extent; ragged last tiles are masked by Pallas automatically.
    if B <= block_b:
        tb = B
    else:
        tb = (block_b // 8) * 8
    grid = (pl.cdiv(B, tb),)

    out = pl.pallas_call(
        functools.partial(
            _numbers_in_cell_kernel, number_to_compare=float(number_to_compare)
        ),
        out_shape=jax.ShapeDtypeStruct((B, _CELLS), jnp.float32),
        grid=grid,
        in_specs=[pl.BlockSpec((tb, 9, _CELLS), lambda i: (i, 0, 0))],
        out_specs=pl.BlockSpec((tb, _CELLS), lambda i: (i, 0)),
        compiler_params=pltpu.CompilerParams(
            dimension_semantics=("parallel",),
        ),
    )(xf)

    return out.reshape(B, 1, 9, 9)        # free reshape back to NCHW


def _reference(x_nchw: jax.Array, number_to_compare: float) -> jax.Array:
    """Pure-JAX re-implementation of the PyTorch forward (NCHW)."""
    s = jnp.sum(x_nchw.astype(jnp.float32), axis=1, keepdims=True)   # (B,1,9,9)
    a = jnp.maximum(s + (1.0 - number_to_compare), 0.0)
    b = jnp.maximum((number_to_compare + 1.0) - s, 0.0)
    return jnp.minimum(a, b)


if __name__ == "__main__":
    key = jax.random.PRNGKey(0)
    B = 2
    NUMBER_TO_COMPARE = 1.0

    # 9 candidate-bit planes over a 9x9 board (typical output of the upstream
    # text->bits layer): values in {0, 1}.
    x = jax.random.bernoulli(key, p=0.2, shape=(B, 9, 9, 9)).astype(jnp.float32)

    out = sudoku_numbers_in_cell(x, NUMBER_TO_COMPARE)
    out = jax.block_until_ready(out)

    ref = _reference(x, NUMBER_TO_COMPARE)
    np.testing.assert_allclose(np.asarray(out), np.asarray(ref), rtol=0, atol=0)
    assert out.shape == (B, 1, 9, 9) and out.dtype == jnp.float32

    # Exercise a multi-tile grid path (B > tile) to make sure tiling/masking
    # is correct as well.
    B2 = 20
    x2 = jax.random.bernoulli(
        jax.random.PRNGKey(1), p=0.2, shape=(B2, 9, 9, 9)
    ).astype(jnp.float32)
    out2 = jax.block_until_ready(
        sudoku_numbers_in_cell(x2, NUMBER_TO_COMPARE, block_b=8)
    )
    np.testing.assert_allclose(
        np.asarray(out2), np.asarray(_reference(x2, NUMBER_TO_COMPARE)), rtol=0, atol=0
    )

    print("KERNEL_OK")
</pallas_src>

<mosaic_0001>
module attributes {stable_mosaic.version = 11 : i64} {
  func.func @_numbers_in_cell_kernel(%arg0: i32, %arg1: memref<2x9x81xf32, #tpu.memory_space<vmem>>, %arg2: memref<2x81xf32, #tpu.memory_space<vmem>>) attributes {dimension_semantics = [#tpu.dimension_semantics<parallel>], iteration_bounds = array<i64: 1>, scalar_prefetch = 0 : i64, scratch_operands = 0 : i64, tpu.core_type = #tpu.core_type<tc>, window_params = [{transform_indices = @transform_0, window_bounds = array<i64: 2, 9, 81>}, {transform_indices = @transform_1, window_bounds = array<i64: 2, 81>}]} {
    %c0 = arith.constant 0 : index
    %c0_0 = arith.constant 0 : index
    %c0_1 = arith.constant 0 : index
    %0 = vector.load %arg1[%c0, %c0_0, %c0_1] : memref<2x9x81xf32, #tpu.memory_space<vmem>>, vector<2x9x81xf32>
    %cst = arith.constant dense<0.000000e+00> : vector<2x81xf32>
    %1 = vector.multi_reduction <add>, %0, %cst [1] : vector<2x9x81xf32> to vector<2x81xf32>
    %cst_2 = arith.constant 0.000000e+00 : f32
    %2 = vector.broadcast %cst_2 : f32 to vector<2x81xf32>
    %3 = arith.addf %1, %2 : vector<2x81xf32>
    %cst_3 = arith.constant 0.000000e+00 : f32
    %4 = vector.broadcast %cst_3 : f32 to vector<2x81xf32>
    %5 = arith.maximumf %3, %4 : vector<2x81xf32>
    %cst_4 = arith.constant 2.000000e+00 : f32
    %6 = vector.broadcast %cst_4 : f32 to vector<2x81xf32>
    %7 = arith.subf %6, %1 : vector<2x81xf32>
    %cst_5 = arith.constant 0.000000e+00 : f32
    %8 = vector.broadcast %cst_5 : f32 to vector<2x81xf32>
    %9 = arith.maximumf %7, %8 : vector<2x81xf32>
    %10 = arith.minimumf %5, %9 : vector<2x81xf32>
    %c0_6 = arith.constant 0 : index
    %c0_7 = arith.constant 0 : index
    %11 = vector.load %arg2[%c0_6, %c0_7] : memref<2x81xf32, #tpu.memory_space<vmem>>, vector<2x81xf32>
    tpu.vector_store %arg2[%c0_6, %c0_7], %10 {strides = array<i32>} : memref<2x81xf32, #tpu.memory_space<vmem>>, vector<2x81xf32>,
    return
  }
  func.func @transform_0(%arg0: i32) -> (i32, i32, i32) {
    %c0_i32 = arith.constant 0 : i32
    %c0_i32_0 = arith.constant 0 : i32
    %c0_i32_1 = arith.constant 0 : i32
    return %arg0, %c0_i32, %c0_i32_0 : i32, i32, i32
  }
  func.func @transform_1(%arg0: i32) -> (i32, i32) {
    %c0_i32 = arith.constant 0 : i32
    %c0_i32_0 = arith.constant 0 : i32
    return %arg0, %c0_i32 : i32, i32
  }
}

</mosaic_0001>

<llo_original>
// kernel: tpu_custom_call.1
$region0: #{tpu_custom_call.1}
  #allocation0 [shape = 'u32[]', space=smem, size = 0x4, offset = 0x4, fixed_abs, tag = 'smem constant byte address 0x4 - core index']
  #allocation1 [shape = 'u32[72,128]{1,0:T(1,128)}', space=vmem, size = 0x9000, scoped, tag = 'internal scratch']
  %s0 = inlined_call_operand.vmem [shape: f32[2,9,81], index: 0, kind: input, shape index: {}]
  %s1 = inlined_call_operand.hbm [shape: f32[2,81], index: 1, kind: output, shape index: {}]
  %s2 = sld [smem:[#allocation0]]
  $region14: #{tpu_custom_call.1} parent=0
    _
  %s4 = ssub.s32 1, %s2
  %s5 = scalar_select 0, %s4, %s2
  $region1: #{tpu_custom_call.1} parent=0
    #allocation2 [shape = 'u8[1024]{0}', space=vmem, size = 0x400, scoped, tag = 'output window, operand 0, single buffered']
    #allocation3 [shape = 's32[1]{0}', space=sflag, size = 0x4, scoped, tag = 'scoped memory for tpu_custom_call.1']
    %6 = vsyncpa [#allocation3], 0
    // Predicated region
    $region2: #{tpu_custom_call.1} parent=1 // pred_check
      _
    $region3: #{tpu_custom_call.1} parent=1 // pred_check_branch
      %8 = sbr.rel (0) target = $region5
    $region4: #{tpu_custom_call.1} parent=1 // pred_region
      _
    $region5: #{tpu_custom_call.1} parent=1 // pred_fallthru
      _
    %v9 = vld [vmem:[%s0] sm:$0xff]
    %v10 = vld [vmem:[%s0 + $0x8] sm:$0x1]
    %v11 = vld [vmem:[%s0 + $0x10] sm:$0xff]
    %v12 = vld [vmem:[%s0 + $0x18] sm:$0x1]
    %vm13 = vcmask 662528
    %v14 = vsel %vm13, %v9, 0.0
    %vm15 = vcmask 655360
    %v16 = vsel %vm15, %v10, 0.0
    %v17 = vadd.f32 %v14, %v16
    %v18 = vrot.slane %v17, 4
    %v19 = vadd.f32 %v17, %v18
    %v20 = vrot.slane %v19, 2
    %v21 = vadd.f32 %v19, %v20
    %v22 = vrot.slane %v21, 1
    %v23 = vadd.f32 %v21, %v22
    %v24 = vsel %vm13, %v11, 0.0
    %v25 = vsel %vm15, %v12, 0.0
    %v26 = vadd.f32 %v24, %v25
    %v27 = vrot.slane %v26, 4
    %v28 = vadd.f32 %v26, %v27
    %v29 = vrot.slane %v28, 2
    %v30 = vadd.f32 %v28, %v29
    %v31 = vrot.slane %v30, 1
    %v32 = vadd.f32 %v30, %v31
    %v33 = vadd.f32 %v23, 0.0
    %v34 = vadd.f32 %v32, 0.0
    %v35 = vmax.f32 %v33, 0.0
    %v36 = vmax.f32 %v34, 0.0
    %v37 = vsub.f32 2.0, %v23
    %v38 = vsub.f32 2.0, %v32
    %v39 = vmax.f32 %v37, 0.0
    %v40 = vmax.f32 %v38, 0.0
    %v41 = vmin.f32 %v35, %v39
    %v42 = vmin.f32 %v36, %v40
    %vm45 = vcmask 1041409
    %v46 = vsel %vm45, %v42, %v41
    %vm48 = vcmask 656384
    %49 = vst.msk [vmem:[#allocation2] sm:$0x3] %vm48, %v46
    // Predicated region
    $region6: #{tpu_custom_call.1} parent=1 // pred_check
      _
    $region7: #{tpu_custom_call.1} parent=1 // pred_check_branch
      %51 = sbr.rel (0) target = $region9
    $region8: #{tpu_custom_call.1} parent=1 // pred_region
      %53 = vsyncadd [#allocation3], 0
      %s55 = sshll.u32 [#allocation2], 4
      %s56 = int_to_ptr.vmem [resolvable:$true] %s55
      %s57 = sshll.u32 %s1, 4
      %s58 = int_to_ptr.hbm [resolvable:$true] %s57
      %60 = dma.vmem_to_hbm [thread:$0]  %s56, 32, %s58, [#allocation3]
    $region9: #{tpu_custom_call.1} parent=1 // pred_fallthru
      _
    // Predicated region
    $region10: #{tpu_custom_call.1} parent=1 // pred_check
      _
    $region11: #{tpu_custom_call.1} parent=1 // pred_check_branch
      %62 = sbr.rel (0) target = $region13
    $region12: #{tpu_custom_call.1} parent=1 // pred_region
      %64 = dma.done [#allocation3], 32
    $region13: #{tpu_custom_call.1} parent=1 // pred_fallthru
      _
    %65 = vsyncpa [#allocation3], 1

</llo_original>
